<compile_context>
chip_gen: v5e
topology: v5e:2x2
jax: 0.10.0
libtpu: 0.0.40
codegen_flags: <defaults>
</compile_context>

<pallas_src>
import functools

import jax
import jax.numpy as jnp
from jax.experimental import pallas as pl
from jax.experimental.pallas import tpu as pltpu


def _round_up(x: int, m: int) -> int:
    return ((x + m - 1) // m) * m


def _vmem_capacity() -> int:
    try:
        return int(pltpu.get_tpu_info().vmem_capacity_bytes)
    except Exception:
        return 64 * 1024 * 1024  # conservative fallback (v7x per-TC VMEM)


def _vmem_bytes(tm: int, tk: int, f_in: int, f_out: int, out_bytes: int) -> int:
    """Rough VMEM footprint of one layer call (double-buffered streams)."""
    return (2 * tm * tk * 1            # A tiles (int8)
            + 2 * tk * f_in * 2        # h (src) tiles (bf16)
            + 2 * tm * f_in * 2        # h (dst) tiles (bf16)
            + 2 * tm * 4               # deg_inv tiles (f32)
            + 2 * 2 * f_in * f_out * 2  # W_self + W_neigh (bf16), resident
            + 2 * f_out * 4            # bias (f32)
            + tm * f_in * 4            # acc scratch (f32)
            + tm * f_out * 4           # self_term scratch (f32)
            + 2 * tm * f_out * out_bytes)  # output tiles


def _pick_tiles(num_dst: int, num_src: int, f_in: int, f_out: int,
                out_bytes: int, vmem_budget: int):
    """Pick (TM, TK): big tiles under the VMEM budget, >=2 row tiles when possible."""
    tm_hi = _round_up(num_dst, 16)            # bf16 sublane packing -> 16
    tk_hi = _round_up(num_src, 128)
    tm_cands = [t for t in (16, 32, 64, 128, 256, 512, 1024) if t <= max(16, tm_hi)]
    # v7x megacore: keep at least 2 row tiles when num_dst allows.
    if tm_hi >= 32:
        tm_limit = _round_up((num_dst + 1) // 2, 16)
        tm_cands = [t for t in tm_cands if t <= tm_limit] or [16]
    tk_cands = [t for t in (128, 256, 512, 1024, 2048) if t <= max(128, tk_hi)]

    best_tm, best_tk = tm_cands[0], tk_cands[0]
    for tm in tm_cands:
        for tk in tk_cands:
            if _vmem_bytes(tm, tk, f_in, f_out, out_bytes) <= vmem_budget:
                if (tm, tk) > (best_tm, best_tk):   # prefer larger TM, then TK
                    best_tm, best_tk = tm, tk
    return best_tm, best_tk


def _sage_layer_kernel(a_ref, h_ref, hdst_ref, dinv_ref, wself_ref, wneigh_ref,
                       b_ref, out_ref, acc_ref, self_ref, *, apply_act):
    """One SAGEConv('mean') layer, tiled over (dst rows, src reduction).

    a_ref      : [TM, TK]      int8 tile of binary adjacency (0/1)
    h_ref      : [TK, F_in]    bf16 tile of src features
    hdst_ref   : [TM, F_in]    bf16 tile of dst features (leading rows of h)
    dinv_ref   : [TM, 1]       f32 per-dst-row 1/degree
    wself_ref  : [F_in, F_out] bf16, resident across the grid
    wneigh_ref : [F_in, F_out] bf16, resident across the grid
    b_ref      : [1, F_out]    f32 bias, resident
    out_ref    : [TM, F_out]   output tile (resident across the K axis)
    acc_ref    : [TM, F_in]    f32 scratch, agg = A @ h
    self_ref   : [TM, F_out]   f32 scratch, self_term = h_dst @ W_self + b
    """
    k = pl.program_id(1)

    @pl.when(k == 0)
    def _init():
        acc_ref[...] = jnp.zeros_like(acc_ref)
        # Reduction-independent work moved off the (busy) last K step.
        self_ref[...] = jnp.dot(hdst_ref[...], wself_ref[...],
                                preferred_element_type=jnp.float32) + b_ref[...]

    # Binary adjacency: int8 in HBM, cast to bf16 in VMEM, f32 accumulation.
    acc_ref[...] += jnp.dot(a_ref[...].astype(jnp.bfloat16), h_ref[...],
                            preferred_element_type=jnp.float32)

    @pl.when(k == pl.num_programs(1) - 1)
    def _finalize():
        # Mean aggregation: f32 1/deg rescale, then bf16 MXU matmul.
        neigh_feat = (acc_ref[...] * dinv_ref[...]).astype(jnp.bfloat16)
        out = self_ref[...] + jnp.dot(neigh_feat, wneigh_ref[...],
                                      preferred_element_type=jnp.float32)
        if apply_act:
            out = jnp.maximum(out, 0.0)            # ReLU
        out_ref[...] = out.astype(out_ref.dtype)   # in-kernel down-cast


def prepare_layer(adj, w_self, w_neigh, b, *, apply_act, out_dtype):
    """Pad/cast the per-layer constants once (adjacency, deg_inv, weights)."""
    num_dst, num_src = adj.shape
    assert num_dst <= num_src, "DGL block: dst nodes are leading src rows"
    in_feat, out_feat = w_self.shape

    f_in = _round_up(in_feat, 128)
    f_out = _round_up(out_feat, 128)
    out_bytes = jnp.dtype(out_dtype).itemsize

    vmem_cap = _vmem_capacity()
    tm, tk = _pick_tiles(num_dst, num_src, f_in, f_out, out_bytes,
                         int(0.6 * vmem_cap))
    m = _round_up(num_dst, tm)
    # K a multiple of both TK and TM so the dst-row stream can reuse h_p.
    k_dim = _round_up(num_src, max(tm, tk))

    # Binary int8 adjacency (0/1 exact); 1/deg applied in f32 in the kernel.
    a_p = jnp.zeros((m, k_dim), jnp.int8).at[:num_dst, :num_src].set(
        adj.astype(jnp.int8))
    deg = jnp.maximum(jnp.sum(adj.astype(jnp.float32), axis=1), 1.0)
    dinv_p = jnp.zeros((m, 1), jnp.float32).at[:num_dst, 0].set(1.0 / deg)

    ws_p = jnp.zeros((f_in, f_out), jnp.bfloat16).at[:in_feat, :out_feat].set(
        w_self.astype(jnp.bfloat16))
    wn_p = jnp.zeros((f_in, f_out), jnp.bfloat16).at[:in_feat, :out_feat].set(
        w_neigh.astype(jnp.bfloat16))
    b_p = jnp.zeros((1, f_out), jnp.float32).at[0, :out_feat].set(
        b.astype(jnp.float32))

    row_tiles = m // tm
    cost = pl.CostEstimate(
        flops=2 * m * k_dim * f_in + 4 * m * f_in * f_out,
        transcendentals=0,
        bytes_accessed=(m * k_dim * 1               # A (int8), once
                        + row_tiles * k_dim * f_in * 2   # h re-streamed per row tile
                        + m * f_in * 2              # dst rows
                        + 2 * f_in * f_out * 2      # weights
                        + f_out * 4 + m * 4         # bias + deg_inv
                        + m * f_out * out_bytes))   # output

    vmem_est = _vmem_bytes(tm, tk, f_in, f_out, out_bytes)
    vmem_limit = int(min(int(0.85 * vmem_cap), max(32 * 1024 * 1024, 2 * vmem_est)))

    return dict(A_p=a_p, dinv_p=dinv_p, ws_p=ws_p, wn_p=wn_p, b_p=b_p,
                TM=tm, TK=tk, M=m, K=k_dim, F_in=f_in, F_out=f_out,
                num_dst=num_dst, num_src=num_src,
                in_feat=in_feat, out_feat=out_feat,
                apply_act=apply_act, out_dtype=out_dtype,
                vmem_limit=vmem_limit, cost=cost)


def sage_layer(prep, h):
    """Run one SAGE layer via a tiled pallas_call using prepared constants."""
    tm, tk = prep["TM"], prep["TK"]
    m, k_dim = prep["M"], prep["K"]
    f_in, f_out = prep["F_in"], prep["F_out"]
    num_dst, num_src = prep["num_dst"], prep["num_src"]
    in_feat, out_feat = prep["in_feat"], prep["out_feat"]
    out_dtype = prep["out_dtype"]

    # Per-layer activation padding (cheap relative to the A stream).
    h_p = jnp.zeros((k_dim, f_in), jnp.bfloat16).at[:num_src, :in_feat].set(
        h[:num_src].astype(jnp.bfloat16))

    kernel = functools.partial(_sage_layer_kernel, apply_act=prep["apply_act"])
    grid = (m // tm, k_dim // tk)

    out_p = pl.pallas_call(
        kernel,
        out_shape=jax.ShapeDtypeStruct((m, f_out), out_dtype),
        grid_spec=pltpu.PrefetchScalarGridSpec(
            num_scalar_prefetch=0,
            grid=grid,
            in_specs=[
                pl.BlockSpec((tm, tk), lambda i, k: (i, k)),        # A tile (int8)
                pl.BlockSpec((tk, f_in), lambda i, k: (k, 0)),      # h (src) tile
                pl.BlockSpec((tm, f_in), lambda i, k: (i, 0)),      # h (dst) rows
                pl.BlockSpec((tm, 1), lambda i, k: (i, 0)),         # 1/deg
                pl.BlockSpec((f_in, f_out), lambda i, k: (0, 0)),   # W_self
                pl.BlockSpec((f_in, f_out), lambda i, k: (0, 0)),   # W_neigh
                pl.BlockSpec((1, f_out), lambda i, k: (0, 0)),      # bias
            ],
            out_specs=pl.BlockSpec((tm, f_out), lambda i, k: (i, 0)),
            scratch_shapes=[pltpu.VMEM((tm, f_in), jnp.float32),
                            pltpu.VMEM((tm, f_out), jnp.float32)],
        ),
        compiler_params=pltpu.CompilerParams(
            dimension_semantics=("parallel", "arbitrary"),
            vmem_limit_bytes=prep["vmem_limit"]),
        cost_estimate=prep["cost"],
    )(prep["A_p"], h_p, h_p, prep["dinv_p"], prep["ws_p"], prep["wn_p"],
      prep["b_p"])

    return out_p[:num_dst, :out_feat]


def prepare_sage(blocks_adj, params):
    """Pad/cast all per-layer constants once (reused every forward call)."""
    n_layers = len(params)
    preps = []
    for i, (adj, (w_self, w_neigh, b)) in enumerate(zip(blocks_adj, params)):
        last = (i == n_layers - 1)
        preps.append(prepare_layer(
            adj, w_self, w_neigh, b,
            apply_act=not last,
            out_dtype=jnp.float32 if last else jnp.bfloat16))
    return preps


def sage_forward(prepared_layers, x):
    """Forward pass of the SAGE module (eval mode: dropout = identity)."""
    h = x
    for prep in prepared_layers:
        h = sage_layer(prep, h)
        # dropout: identity (eval mode) -- see TODO(synk) above
    return h


def sage_reference(blocks_adj, x, params):
    """Pure-JAX f32 reference for correctness checking."""
    h = x.astype(jnp.float32)
    n_layers = len(params)
    for i, (adj, (w_self, w_neigh, b)) in enumerate(zip(blocks_adj, params)):
        num_dst = adj.shape[0]
        adj = adj.astype(jnp.float32)
        deg = jnp.maximum(jnp.sum(adj, axis=1, keepdims=True), 1.0)
        neigh = ((adj / deg) @ h) @ w_neigh
        h = h[:num_dst] @ w_self + neigh + b[None, :]
        if i != n_layers - 1:
            h = jnp.maximum(h, 0.0)
    return h


def make_adjacency(key, num_dst, num_src):
    """Deterministic random binary bipartite block with guaranteed self-edge."""
    adj = (jax.random.uniform(key, (num_dst, num_src)) < 0.4).astype(jnp.float32)
    self_edge = jnp.zeros((num_dst, num_src), jnp.float32).at[
        jnp.arange(num_dst), jnp.arange(num_dst)].set(1.0)
    return jnp.maximum(adj, self_edge)


def init_sage_params(key, in_feats, n_hidden, n_classes, n_layers):
    params = []
    for i in range(n_layers):
        in_dim = in_feats if i == 0 else n_hidden
        out_dim = n_classes if i == n_layers - 1 else n_hidden
        key, k1, k2 = jax.random.split(key, 3)
        scale = 1.0 / jnp.sqrt(jnp.float32(in_dim))
        w_self = jax.random.uniform(k1, (in_dim, out_dim), jnp.float32,
                                    -scale, scale)
        w_neigh = jax.random.uniform(k2, (in_dim, out_dim), jnp.float32,
                                     -scale, scale)
        b = jnp.zeros((out_dim,), jnp.float32)
        params.append((w_self, w_neigh, b))
    return params


if __name__ == "__main__":
    # Small, forward-consistent shapes.
    in_feats, n_hidden, n_classes, n_layers = 32, 32, 8, 2
    num_src0, num_dst0 = 16, 8      # block 0: 16 src -> 8 dst
    num_src1, num_dst1 = 8, 4       # block 1:  8 src -> 4 dst

    root = jax.random.PRNGKey(0)
    k_x, k_a0, k_a1, k_p = jax.random.split(root, 4)

    x = jax.random.normal(k_x, (num_src0, in_feats), jnp.float32)
    blocks_adj = [
        make_adjacency(k_a0, num_dst0, num_src0),
        make_adjacency(k_a1, num_dst1, num_src1),
    ]
    params = init_sage_params(k_p, in_feats, n_hidden, n_classes, n_layers)

    prepared = prepare_sage(blocks_adj, params)   # pad/cast constants once
    out = sage_forward(prepared, x)
    out = jax.block_until_ready(out)
    assert out.shape == (num_dst1, n_classes), out.shape

    ref = sage_reference(blocks_adj, x, params)
    max_err = float(jnp.max(jnp.abs(out.astype(jnp.float32) - ref)))
    assert jnp.allclose(out.astype(jnp.float32), ref, atol=1e-1, rtol=1e-1), max_err

    print("KERNEL_OK")
</pallas_src>

<mosaic_0001>
module attributes {stable_mosaic.version = 11 : i64} {
  func.func @_sage_layer_kernel(%arg0: i32, %arg1: i32, %arg2: memref<16x128xi8, #tpu.memory_space<vmem>>, %arg3: memref<128x128xbf16, #tpu.memory_space<vmem>>, %arg4: memref<16x128xbf16, #tpu.memory_space<vmem>>, %arg5: memref<16x1xf32, #tpu.memory_space<vmem>>, %arg6: memref<128x128xbf16, #tpu.memory_space<vmem>>, %arg7: memref<128x128xbf16, #tpu.memory_space<vmem>>, %arg8: memref<1x128xf32, #tpu.memory_space<vmem>>, %arg9: memref<16x128xbf16, #tpu.memory_space<vmem>>, %arg10: memref<16x128xf32, #tpu.memory_space<vmem>>, %arg11: memref<16x128xf32, #tpu.memory_space<vmem>>) attributes {dimension_semantics = [#tpu.dimension_semantics<parallel>, #tpu.dimension_semantics<arbitrary>], iteration_bounds = array<i64: 1, 1>, scalar_prefetch = 0 : i64, scratch_operands = 2 : i64, tpu.core_type = #tpu.core_type<tc>, window_params = [{transform_indices = @transform_0, window_bounds = array<i64: 16, 128>}, {transform_indices = @transform_1, window_bounds = array<i64: 128, 128>}, {transform_indices = @transform_2, window_bounds = array<i64: 16, 128>}, {transform_indices = @transform_3, window_bounds = array<i64: 16, 1>}, {pipeline_mode = #tpu.pipeline_mode<synchronous>, transform_indices = @transform_4, window_bounds = array<i64: 128, 128>}, {pipeline_mode = #tpu.pipeline_mode<synchronous>, transform_indices = @transform_5, window_bounds = array<i64: 128, 128>}, {pipeline_mode = #tpu.pipeline_mode<synchronous>, transform_indices = @transform_6, window_bounds = array<i64: 1, 128>}, {transform_indices = @transform_7, window_bounds = array<i64: 16, 128>}]} {
    %c0_i32 = arith.constant 0 : i32
    %0 = arith.cmpi eq, %arg1, %c0_i32 : i32
    %1 = arith.extui %0 : i1 to i32
    %c0_i32_0 = arith.constant 0 : i32
    %2 = arith.cmpi ne, %1, %c0_i32_0 : i32
    scf.if %2 {
      %cst_10 = arith.constant 0.000000e+00 : f32
      %13 = vector.broadcast %cst_10 : f32 to vector<16x128xf32>
      %c0_11 = arith.constant 0 : index
      %c0_12 = arith.constant 0 : index
      %14 = vector.load %arg10[%c0_11, %c0_12] : memref<16x128xf32, #tpu.memory_space<vmem>>, vector<16x128xf32>
      tpu.vector_store %arg10[%c0_11, %c0_12], %13 {strides = array<i32>} : memref<16x128xf32, #tpu.memory_space<vmem>>, vector<16x128xf32>,
      %c0_13 = arith.constant 0 : index
      %c0_14 = arith.constant 0 : index
      %15 = vector.load %arg4[%c0_13, %c0_14] : memref<16x128xbf16, #tpu.memory_space<vmem>>, vector<16x128xbf16>
      %c0_15 = arith.constant 0 : index
      %c0_16 = arith.constant 0 : index
      %16 = vector.load %arg6[%c0_15, %c0_16] : memref<128x128xbf16, #tpu.memory_space<vmem>>, vector<128x128xbf16>
      %cst_17 = arith.constant dense<0.000000e+00> : vector<16x128xf32>
      %17 = tpu.matmul %15, %16, %cst_17 {dimension_numbers = #tpu.dot_dimension_numbers<[1], [0], [0], [1], [0, 0, 1, 1], [], []>} : vector<16x128xbf16>, vector<128x128xbf16>, vector<16x128xf32> -> vector<16x128xf32>
      %c0_18 = arith.constant 0 : index
      %c0_19 = arith.constant 0 : index
      %18 = vector.load %arg8[%c0_18, %c0_19] : memref<1x128xf32, #tpu.memory_space<vmem>>, vector<1x128xf32>
      %19 = vector.broadcast %18 : vector<1x128xf32> to vector<16x128xf32>
      %20 = arith.addf %17, %19 : vector<16x128xf32>
      %c0_20 = arith.constant 0 : index
      %c0_21 = arith.constant 0 : index
      %21 = vector.load %arg11[%c0_20, %c0_21] : memref<16x128xf32, #tpu.memory_space<vmem>>, vector<16x128xf32>
      tpu.vector_store %arg11[%c0_20, %c0_21], %20 {strides = array<i32>} : memref<16x128xf32, #tpu.memory_space<vmem>>, vector<16x128xf32>,
    } else {
    }
    %c0 = arith.constant 0 : index
    %c0_1 = arith.constant 0 : index
    %3 = vector.load %arg10[%c0, %c0_1] : memref<16x128xf32, #tpu.memory_space<vmem>>, vector<16x128xf32>
    %c0_2 = arith.constant 0 : index
    %c0_3 = arith.constant 0 : index
    %4 = vector.load %arg2[%c0_2, %c0_3] : memref<16x128xi8, #tpu.memory_space<vmem>>, vector<16x128xi8>
    %5 = arith.sitofp %4 : vector<16x128xi8> to vector<16x128xbf16>
    %c0_4 = arith.constant 0 : index
    %c0_5 = arith.constant 0 : index
    %6 = vector.load %arg3[%c0_4, %c0_5] : memref<128x128xbf16, #tpu.memory_space<vmem>>, vector<128x128xbf16>
    %cst = arith.constant dense<0.000000e+00> : vector<16x128xf32>
    %7 = tpu.matmul %5, %6, %cst {dimension_numbers = #tpu.dot_dimension_numbers<[1], [0], [0], [1], [0, 0, 1, 1], [], []>} : vector<16x128xbf16>, vector<128x128xbf16>, vector<16x128xf32> -> vector<16x128xf32>
    %8 = arith.addf %3, %7 : vector<16x128xf32>
    %c0_6 = arith.constant 0 : index
    %c0_7 = arith.constant 0 : index
    %9 = vector.load %arg10[%c0_6, %c0_7] : memref<16x128xf32, #tpu.memory_space<vmem>>, vector<16x128xf32>
    tpu.vector_store %arg10[%c0_6, %c0_7], %8 {strides = array<i32>} : memref<16x128xf32, #tpu.memory_space<vmem>>, vector<16x128xf32>,
    %c0_i32_8 = arith.constant 0 : i32
    %10 = arith.cmpi eq, %arg1, %c0_i32_8 : i32
    %11 = arith.extui %10 : i1 to i32
    %c0_i32_9 = arith.constant 0 : i32
    %12 = arith.cmpi ne, %11, %c0_i32_9 : i32
    scf.if %12 {
      %c0_10 = arith.constant 0 : index
      %c0_11 = arith.constant 0 : index
      %13 = vector.load %arg10[%c0_10, %c0_11] : memref<16x128xf32, #tpu.memory_space<vmem>>, vector<16x128xf32>
      %c0_12 = arith.constant 0 : index
      %c0_13 = arith.constant 0 : index
      %14 = vector.load %arg5[%c0_12, %c0_13] : memref<16x1xf32, #tpu.memory_space<vmem>>, vector<16x1xf32>
      %15 = vector.broadcast %14 : vector<16x1xf32> to vector<16x128xf32>
      %16 = arith.mulf %13, %15 : vector<16x128xf32>
      %17 = arith.truncf %16 : vector<16x128xf32> to vector<16x128xbf16>
      %c0_14 = arith.constant 0 : index
      %c0_15 = arith.constant 0 : index
      %18 = vector.load %arg11[%c0_14, %c0_15] : memref<16x128xf32, #tpu.memory_space<vmem>>, vector<16x128xf32>
      %c0_16 = arith.constant 0 : index
      %c0_17 = arith.constant 0 : index
      %19 = vector.load %arg7[%c0_16, %c0_17] : memref<128x128xbf16, #tpu.memory_space<vmem>>, vector<128x128xbf16>
      %cst_18 = arith.constant dense<0.000000e+00> : vector<16x128xf32>
      %20 = tpu.matmul %17, %19, %cst_18 {dimension_numbers = #tpu.dot_dimension_numbers<[1], [0], [0], [1], [0, 0, 1, 1], [], []>} : vector<16x128xbf16>, vector<128x128xbf16>, vector<16x128xf32> -> vector<16x128xf32>
      %21 = arith.addf %18, %20 : vector<16x128xf32>
      %cst_19 = arith.constant 0.000000e+00 : f32
      %22 = vector.broadcast %cst_19 : f32 to vector<16x128xf32>
      %23 = arith.maximumf %21, %22 : vector<16x128xf32>
      %24 = arith.truncf %23 : vector<16x128xf32> to vector<16x128xbf16>
      %c0_20 = arith.constant 0 : index
      %c0_21 = arith.constant 0 : index
      %25 = vector.load %arg9[%c0_20, %c0_21] : memref<16x128xbf16, #tpu.memory_space<vmem>>, vector<16x128xbf16>
      tpu.vector_store %arg9[%c0_20, %c0_21], %24 {strides = array<i32>} : memref<16x128xbf16, #tpu.memory_space<vmem>>, vector<16x128xbf16>,
    } else {
    }
    return
  }
  func.func @transform_0(%arg0: i32, %arg1: i32) -> (i32, i32) {
    %c0_i32 = arith.constant 0 : i32
    return %arg0, %arg1 : i32, i32
  }
  func.func @transform_1(%arg0: i32, %arg1: i32) -> (i32, i32) {
    %c0_i32 = arith.constant 0 : i32
    %c0_i32_0 = arith.constant 0 : i32
    return %arg1, %c0_i32 : i32, i32
  }
  func.func @transform_2(%arg0: i32, %arg1: i32) -> (i32, i32) {
    %c0_i32 = arith.constant 0 : i32
    %c0_i32_0 = arith.constant 0 : i32
    return %arg0, %c0_i32 : i32, i32
  }
  func.func @transform_3(%arg0: i32, %arg1: i32) -> (i32, i32) {
    %c0_i32 = arith.constant 0 : i32
    %c0_i32_0 = arith.constant 0 : i32
    return %arg0, %c0_i32 : i32, i32
  }
  func.func @transform_4(%arg0: i32, %arg1: i32) -> (i32, i32) {
    %c0_i32 = arith.constant 0 : i32
    %c0_i32_0 = arith.constant 0 : i32
    %c0_i32_1 = arith.constant 0 : i32
    return %c0_i32, %c0_i32_0 : i32, i32
  }
  func.func @transform_5(%arg0: i32, %arg1: i32) -> (i32, i32) {
    %c0_i32 = arith.constant 0 : i32
    %c0_i32_0 = arith.constant 0 : i32
    %c0_i32_1 = arith.constant 0 : i32
    return %c0_i32, %c0_i32_0 : i32, i32
  }
  func.func @transform_6(%arg0: i32, %arg1: i32) -> (i32, i32) {
    %c0_i32 = arith.constant 0 : i32
    %c0_i32_0 = arith.constant 0 : i32
    %c0_i32_1 = arith.constant 0 : i32
    return %c0_i32, %c0_i32_0 : i32, i32
  }
  func.func @transform_7(%arg0: i32, %arg1: i32) -> (i32, i32) {
    %c0_i32 = arith.constant 0 : i32
    %c0_i32_0 = arith.constant 0 : i32
    return %arg0, %c0_i32 : i32, i32
  }
}

</mosaic_0001>

<llo_original>
// kernel: tpu_custom_call.1
$region0: #{tpu_custom_call.1}
  #allocation0 [shape = 'u32[]', space=smem, size = 0x4, offset = 0x4, fixed_abs, tag = 'smem constant byte address 0x4 - core index']
  #allocation1 [shape = 'u32[72,128]{1,0:T(1,128)}', space=vmem, size = 0x9000, scoped, tag = 'internal scratch']
  #allocation2 [shape = 'f32[16,128]{1,0:T(8,128)}', space=vmem, size = 0x2000, scoped, tag = 'scratch operand']
  #allocation3 [shape = 'f32[16,128]{1,0:T(8,128)}', space=vmem, size = 0x2000, scoped, tag = 'scratch operand']
  %s0 = inlined_call_operand.vmem [shape: s8[16,128], index: 0, kind: input, shape index: {}]
  %s1 = inlined_call_operand.hbm [shape: bf16[128,128], index: 1, kind: input, shape index: {}]
  %s2 = inlined_call_operand.hbm [shape: bf16[128,128], index: 2, kind: input, shape index: {}]
  %s3 = inlined_call_operand.vmem [shape: f32[16,1], index: 3, kind: input, shape index: {}]
  %s4 = inlined_call_operand.hbm [shape: bf16[128,128], index: 4, kind: input, shape index: {}]
  %s5 = inlined_call_operand.hbm [shape: bf16[128,128], index: 5, kind: input, shape index: {}]
  %s6 = inlined_call_operand.vmem [shape: f32[1,128], index: 6, kind: input, shape index: {}]
  %s7 = inlined_call_operand.hbm [shape: bf16[16,128], index: 7, kind: output, shape index: {}]
  %s8 = sld [smem:[#allocation0]]
  $region62: #{tpu_custom_call.1} parent=0
    _
  %s10 = ssub.s32 1, %s8
  %s11 = scalar_select 0, %s10, %s8
  $region1: #{tpu_custom_call.1} parent=0
    #allocation4 [shape = 'u8[32768]{0}', space=vmem, size = 0x8000, scoped, tag = 'input window, operand 1, single buffered']
    #allocation5 [shape = 's32[1]{0}', space=sflag, size = 0x4, scoped, tag = 'scoped memory for tpu_custom_call.1']
    #allocation6 [shape = 's32[1]{0}', space=sflag, size = 0x4, scoped, tag = 'scoped memory for tpu_custom_call.1']
    #allocation7 [shape = 'u8[4096]{0}', space=vmem, size = 0x1000, scoped, tag = 'input window, operand 2, single buffered']
    #allocation8 [shape = 's32[1]{0}', space=sflag, size = 0x4, scoped, tag = 'scoped memory for tpu_custom_call.1']
    #allocation9 [shape = 'u8[32768]{0}', space=vmem, size = 0x8000, scoped, tag = 'input window, operand 4, single buffered']
    #allocation10 [shape = 'u8[32768]{0}', space=vmem, size = 0x8000, scoped, tag = 'input window, operand 5, single buffered']
    #allocation11 [shape = 's32[1]{0}', space=sflag, size = 0x4, scoped, tag = 'scoped memory for tpu_custom_call.1']
    #allocation12 [shape = 'u8[4096]{0}', space=vmem, size = 0x1000, scoped, tag = 'output window, operand 0, single buffered']
    %12 = vsyncpa [#allocation5], 0
    %13 = vsyncpa [#allocation8], 0
    %14 = vsyncpa [#allocation11], 0
    %15 = vsyncpa [#allocation6], 0
    // Predicated region
    $region2: #{tpu_custom_call.1} parent=1 // pred_check
      _
    $region3: #{tpu_custom_call.1} parent=1 // pred_check_branch
      %17 = sbr.rel (0) target = $region5
    $region4: #{tpu_custom_call.1} parent=1 // pred_region
      _
    $region5: #{tpu_custom_call.1} parent=1 // pred_fallthru
      _
    // Predicated region
    $region6: #{tpu_custom_call.1} parent=1 // pred_check
      _
    $region7: #{tpu_custom_call.1} parent=1 // pred_check_branch
      %19 = sbr.rel (0) target = $region9
    $region8: #{tpu_custom_call.1} parent=1 // pred_region
      %21 = vsyncadd [#allocation5], 0
      %s22 = sshll.u32 %s1, 4
      %s23 = int_to_ptr.hbm [resolvable:$true] %s22
      %s24 = sshll.u32 [#allocation4], 4
      %s25 = int_to_ptr.vmem [resolvable:$true] %s24
      %30 = dma.hbm_to_vmem [thread:$0]  %s23, 1024, %s25, [#allocation5], 64, 64, 4
    $region9: #{tpu_custom_call.1} parent=1 // pred_fallthru
      _
    // Predicated region
    $region10: #{tpu_custom_call.1} parent=1 // pred_check
      _
    $region11: #{tpu_custom_call.1} parent=1 // pred_check_branch
      %32 = sbr.rel (0) target = $region13
    $region12: #{tpu_custom_call.1} parent=1 // pred_region
      %34 = vsyncadd [#allocation8], 0
      %s35 = sshll.u32 %s2, 4
      %s36 = int_to_ptr.hbm [resolvable:$true] %s35
      %s37 = sshll.u32 [#allocation7], 4
      %s38 = int_to_ptr.vmem [resolvable:$true] %s37
      %43 = dma.hbm_to_vmem [thread:$0]  %s36, 128, %s38, [#allocation8], 64, 64, 4
    $region13: #{tpu_custom_call.1} parent=1 // pred_fallthru
      _
    // Predicated region
    $region14: #{tpu_custom_call.1} parent=1 // pred_check
      _
    $region15: #{tpu_custom_call.1} parent=1 // pred_check_branch
      %45 = sbr.rel (0) target = $region17
    $region16: #{tpu_custom_call.1} parent=1 // pred_region
      _
    $region17: #{tpu_custom_call.1} parent=1 // pred_fallthru
      _
    // Predicated region
    $region18: #{tpu_custom_call.1} parent=1 // pred_check
      _
    $region19: #{tpu_custom_call.1} parent=1 // pred_check_branch
      %47 = sbr.rel (0) target = $region21
    $region20: #{tpu_custom_call.1} parent=1 // pred_region
      %49 = vsyncadd [#allocation8], 0
      %s50 = sshll.u32 %s4, 4
      %s51 = int_to_ptr.hbm [resolvable:$true] %s50
      %s52 = sshll.u32 [#allocation9], 4
      %s53 = int_to_ptr.vmem [resolvable:$true] %s52
      %58 = dma.hbm_to_vmem [thread:$0]  %s51, 1024, %s53, [#allocation8], 64, 64, 4
    $region21: #{tpu_custom_call.1} parent=1 // pred_fallthru
      _
    // Predicated region
    $region22: #{tpu_custom_call.1} parent=1 // pred_check
      _
    $region23: #{tpu_custom_call.1} parent=1 // pred_check_branch
      %60 = sbr.rel (0) target = $region25
    $region24: #{tpu_custom_call.1} parent=1 // pred_region
      %62 = vsyncadd [#allocation11], 0
      %s63 = sshll.u32 %s5, 4
      %s64 = int_to_ptr.hbm [resolvable:$true] %s63
      %s65 = sshll.u32 [#allocation10], 4
      %s66 = int_to_ptr.vmem [resolvable:$true] %s65
      %71 = dma.hbm_to_vmem [thread:$0]  %s64, 1024, %s66, [#allocation11], 64, 64, 4
    $region25: #{tpu_custom_call.1} parent=1 // pred_fallthru
      _
    // Predicated region
    $region26: #{tpu_custom_call.1} parent=1 // pred_check
      _
    $region27: #{tpu_custom_call.1} parent=1 // pred_check_branch
      %73 = sbr.rel (0) target = $region29
    $region28: #{tpu_custom_call.1} parent=1 // pred_region
      _
    $region29: #{tpu_custom_call.1} parent=1 // pred_fallthru
      _
    // Predicated region
    $region30: #{tpu_custom_call.1} parent=1 // pred_check
      _
    $region31: #{tpu_custom_call.1} parent=1 // pred_check_branch
      %75 = sbr.rel (0) target = $region33
    $region32: #{tpu_custom_call.1} parent=1 // pred_region
      %77 = dma.done [#allocation5], 1024
    $region33: #{tpu_custom_call.1} parent=1 // pred_fallthru
      _
    // Predicated region
    $region34: #{tpu_custom_call.1} parent=1 // pred_check
      _
    $region35: #{tpu_custom_call.1} parent=1 // pred_check_branch
      %79 = sbr.rel (0) target = $region37
    $region36: #{tpu_custom_call.1} parent=1 // pred_region
      %81 = dma.done [#allocation8], 128
    $region37: #{tpu_custom_call.1} parent=1 // pred_fallthru
      _
    // Predicated region
    $region38: #{tpu_custom_call.1} parent=1 // pred_check
      _
    $region39: #{tpu_custom_call.1} parent=1 // pred_check_branch
      %83 = sbr.rel (0) target = $region41
    $region40: #{tpu_custom_call.1} parent=1 // pred_region
      %85 = dma.done [#allocation8], 1024
    $region41: #{tpu_custom_call.1} parent=1 // pred_fallthru
      _
    // Predicated region
    $region42: #{tpu_custom_call.1} parent=1 // pred_check
      _
    $region43: #{tpu_custom_call.1} parent=1 // pred_check_branch
      %87 = sbr.rel (0) target = $region45
    $region44: #{tpu_custom_call.1} parent=1 // pred_region
      %89 = dma.done [#allocation11], 1024
    $region45: #{tpu_custom_call.1} parent=1 // pred_fallthru
      _
    %p90 = scmp.eq.s32.totalorder 0, 0
    // Predicated region
    $region46: #{tpu_custom_call.1} parent=1 // pred_check
      %p91 = pneg %p90
    $region47: #{tpu_custom_call.1} parent=1 // pred_check_branch
      %93 = sbr.rel (%p91) target = $region49
    $region48: #{tpu_custom_call.1} parent=1 // pred_region
      %94 = vst [vmem:[#allocation2] sm:$0xff] 0.0
      %95 = vst [vmem:[#allocation2 + $0x8] sm:$0xff] 0.0
      %v96 = vld [vmem:[#allocation7] sm:$0xf]
      %v97 = vld [vmem:[#allocation7 + $0x4] sm:$0xf]
      %v98 = vld [vmem:[#allocation9] sm:$0xf]
      %v99 = vld [vmem:[#allocation9 + $0x4] sm:$0xf]
      %v100 = vld [vmem:[#allocation9 + $0x8] sm:$0xf]
      %v101 = vld [vmem:[#allocation9 + $0xc] sm:$0xf]
      %v102 = vld [vmem:[#allocation9 + $0x10] sm:$0xf]
      %v103 = vld [vmem:[#allocation9 + $0x14] sm:$0xf]
      %v104 = vld [vmem:[#allocation9 + $0x18] sm:$0xf]
      %v105 = vld [vmem:[#allocation9 + $0x1c] sm:$0xf]
      %v106 = vld [vmem:[#allocation9 + $0x20] sm:$0xf]
      %v107 = vld [vmem:[#allocation9 + $0x24] sm:$0xf]
      %v108 = vld [vmem:[#allocation9 + $0x28] sm:$0xf]
      %v109 = vld [vmem:[#allocation9 + $0x2c] sm:$0xf]
      %v110 = vld [vmem:[#allocation9 + $0x30] sm:$0xf]
      %v111 = vld [vmem:[#allocation9 + $0x34] sm:$0xf]
      %v112 = vld [vmem:[#allocation9 + $0x38] sm:$0xf]
      %v113 = vld [vmem:[#allocation9 + $0x3c] sm:$0xf]
      %v114 = vld [vmem:[%s6] sm:$0x1]
      %v116 = vperm.slane %v114, 0
      %v120 = vunpack.c.l.b16 %v96
      %v121 = vunpack.c.l.b16 %v97
      %v122 = vpack.c.b16 %v121, %v120
      %v140 = vunpack.c.l.b16 %v98
      %v141 = vunpack.c.l.b16 %v99
      %v142 = vunpack.c.l.b16 %v100
      %v143 = vunpack.c.l.b16 %v101
      %v144 = vunpack.c.l.b16 %v102
      %v145 = vunpack.c.l.b16 %v103
      %v146 = vunpack.c.l.b16 %v104
      %v147 = vunpack.c.l.b16 %v105
      %v148 = vunpack.c.l.b16 %v106
      %v149 = vunpack.c.l.b16 %v107
      %v150 = vunpack.c.l.b16 %v108
      %v151 = vunpack.c.l.b16 %v109
      %v152 = vunpack.c.l.b16 %v110
      %v153 = vunpack.c.l.b16 %v111
      %v154 = vunpack.c.l.b16 %v112
      %v155 = vunpack.c.l.b16 %v113
      %v156 = vpack.c.b16 %v141, %v140
      %v157 = vpack.c.b16 %v143, %v142
      %v158 = vpack.c.b16 %v145, %v144
      %v159 = vpack.c.b16 %v147, %v146
      %v160 = vpack.c.b16 %v149, %v148
      %v161 = vpack.c.b16 %v151, %v150
      %v162 = vpack.c.b16 %v153, %v152
      %v163 = vpack.c.b16 %v155, %v154
      %172 = vmatpush.bf16.msra.mxu0 %v163
      %173 = vmatpush.bf16.msra.mxu0 %v162
      %174 = vmatpush.bf16.msra.mxu0 %v161
      %175 = vmatpush.bf16.msra.mxu0 %v160
      %176 = vmatpush.bf16.msra.mxu0 %v159
      %177 = vmatpush.bf16.msra.mxu0 %v158
      %178 = vmatpush.bf16.msra.mxu0 %v157
      %179 = vmatpush.bf16.msra.mxu0 %v156
      %180 = vmatmul.bf16.gmra.mxu0 %v122
      %v181 = vpop.f32.mrf.mxu0
      %v182 = vadd.f32 %v116, %v181
      %v183 = vpop.f32.mrf.mxu0
      %v184 = vadd.f32 %v116, %v183
      %185 = vdwg.mxu0
      %186 = vst [vmem:[#allocation3] sm:$0xff] %v182
      %187 = vst [vmem:[#allocation3 + $0x8] sm:$0xff] %v184
    $region49: #{tpu_custom_call.1} parent=1 // pred_fallthru
      _
    %v188 = vld [vmem:[#allocation2] sm:$0xff]
    %v189 = vld [vmem:[#allocation2 + $0x8] sm:$0xff]
    %v190 = vld [vmem:[%s0] sm:$0x3]
    %v191 = vld [vmem:[%s0 + $0x2] sm:$0x3]
    %v192 = vunpack.c.0.s8 %v190
    %v193 = vunpack.c.0.s8 %v191
    %v194 = vcvt.s32.f32 %v192
    %v195 = vcvt.s32.f32 %v193
    %v196 = vpack.c.bf16 %v195, %v194
    %v197 = vld [vmem:[#allocation4] sm:$0xf]
    %v198 = vld [vmem:[#allocation4 + $0x4] sm:$0xf]
    %v199 = vld [vmem:[#allocation4 + $0x8] sm:$0xf]
    %v200 = vld [vmem:[#allocation4 + $0xc] sm:$0xf]
    %v201 = vld [vmem:[#allocation4 + $0x10] sm:$0xf]
    %v202 = vld [vmem:[#allocation4 + $0x14] sm:$0xf]
    %v203 = vld [vmem:[#allocation4 + $0x18] sm:$0xf]
    %v204 = vld [vmem:[#allocation4 + $0x1c] sm:$0xf]
    %v205 = vld [vmem:[#allocation4 + $0x20] sm:$0xf]
    %v206 = vld [vmem:[#allocation4 + $0x24] sm:$0xf]
    %v207 = vld [vmem:[#allocation4 + $0x28] sm:$0xf]
    %v208 = vld [vmem:[#allocation4 + $0x2c] sm:$0xf]
    %v209 = vld [vmem:[#allocation4 + $0x30] sm:$0xf]
    %v210 = vld [vmem:[#allocation4 + $0x34] sm:$0xf]
    %v211 = vld [vmem:[#allocation4 + $0x38] sm:$0xf]
    %v212 = vld [vmem:[#allocation4 + $0x3c] sm:$0xf]
    %v229 = vunpack.c.l.b16 %v197
    %v230 = vunpack.c.l.b16 %v198
    %v231 = vunpack.c.l.b16 %v199
    %v232 = vunpack.c.l.b16 %v200
    %v233 = vunpack.c.l.b16 %v201
    %v234 = vunpack.c.l.b16 %v202
    %v235 = vunpack.c.l.b16 %v203
    %v236 = vunpack.c.l.b16 %v204
    %v237 = vunpack.c.l.b16 %v205
    %v238 = vunpack.c.l.b16 %v206
    %v239 = vunpack.c.l.b16 %v207
    %v240 = vunpack.c.l.b16 %v208
    %v241 = vunpack.c.l.b16 %v209
    %v242 = vunpack.c.l.b16 %v210
    %v243 = vunpack.c.l.b16 %v211
    %v244 = vunpack.c.l.b16 %v212
    %v245 = vpack.c.b16 %v230, %v229
    %v246 = vpack.c.b16 %v232, %v231
    %v247 = vpack.c.b16 %v234, %v233
    %v248 = vpack.c.b16 %v236, %v235
    %v249 = vpack.c.b16 %v238, %v237
    %v250 = vpack.c.b16 %v240, %v239
    %v251 = vpack.c.b16 %v242, %v241
    %v252 = vpack.c.b16 %v244, %v243
    %261 = vmatpush.bf16.msra.mxu0 %v252
    %262 = vmatpush.bf16.msra.mxu0 %v251
    %263 = vmatpush.bf16.msra.mxu0 %v250
    %264 = vmatpush.bf16.msra.mxu0 %v249
    %265 = vmatpush.bf16.msra.mxu0 %v248
    %266 = vmatpush.bf16.msra.mxu0 %v247
    %267 = vmatpush.bf16.msra.mxu0 %v246
    %268 = vmatpush.bf16.msra.mxu0 %v245
    %269 = vmatmul.bf16.gmra.mxu0 %v196
    %v270 = vpop.f32.mrf.mxu0
    %v271 = vadd.f32 0.0, %v270
    %v272 = vpop.f32.mrf.mxu0
    %v273 = vadd.f32 0.0, %v272
    %274 = vdwg.mxu0
    %v275 = vadd.f32 %v188, %v271
    %v276 = vadd.f32 %v189, %v273
    %277 = vst [vmem:[#allocation2] sm:$0xff] %v275
    %278 = vst [vmem:[#allocation2 + $0x8] sm:$0xff] %v276
    // Predicated region
    $region50: #{tpu_custom_call.1} parent=1 // pred_check
      %p279 = pneg %p90
    $region51: #{tpu_custom_call.1} parent=1 // pred_check_branch
      %281 = sbr.rel (%p279) target = $region53
    $region52: #{tpu_custom_call.1} parent=1 // pred_region
      %v282 = vld [vmem:[#allocation2] sm:$0xff]
      %v283 = vld [vmem:[#allocation2 + $0x8] sm:$0xff]
      %v284 = vld [vmem:[%s3] sm:$0xff]
      %v285 = vld [vmem:[%s3 + $0x8] sm:$0xff]
      %287 = vset.pattern.permute.xlu0 0
      %288 = vperm.xlu0 %287, %v284
      %v289 = vpop.permute.xlu0 %288
      %292 = vset.pattern.permute.xlu0 0
      %293 = vperm.xlu0 %292, %v285
      %v294 = vpop.permute.xlu0 %293
      %v296 = vmul.f32 %v282, %v289
      %v297 = vmul.f32 %v283, %v294
      %v298 = vpack.c.bf16 %v297, %v296
      %v299 = vld [vmem:[#allocation3] sm:$0xff]
      %v300 = vld [vmem:[#allocation3 + $0x8] sm:$0xff]
      %v301 = vld [vmem:[#allocation10] sm:$0xf]
      %v302 = vld [vmem:[#allocation10 + $0x4] sm:$0xf]
      %v303 = vld [vmem:[#allocation10 + $0x8] sm:$0xf]
      %v304 = vld [vmem:[#allocation10 + $0xc] sm:$0xf]
      %v305 = vld [vmem:[#allocation10 + $0x10] sm:$0xf]
      %v306 = vld [vmem:[#allocation10 + $0x14] sm:$0xf]
      %v307 = vld [vmem:[#allocation10 + $0x18] sm:$0xf]
      %v308 = vld [vmem:[#allocation10 + $0x1c] sm:$0xf]
      %v309 = vld [vmem:[#allocation10 + $0x20] sm:$0xf]
      %v310 = vld [vmem:[#allocation10 + $0x24] sm:$0xf]
      %v311 = vld [vmem:[#allocation10 + $0x28] sm:$0xf]
      %v312 = vld [vmem:[#allocation10 + $0x2c] sm:$0xf]
      %v313 = vld [vmem:[#allocation10 + $0x30] sm:$0xf]
      %v314 = vld [vmem:[#allocation10 + $0x34] sm:$0xf]
      %v315 = vld [vmem:[#allocation10 + $0x38] sm:$0xf]
      %v316 = vld [vmem:[#allocation10 + $0x3c] sm:$0xf]
      %v333 = vunpack.c.l.b16 %v301
      %v334 = vunpack.c.l.b16 %v302
      %v335 = vunpack.c.l.b16 %v303
      %v336 = vunpack.c.l.b16 %v304
      %v337 = vunpack.c.l.b16 %v305
      %v338 = vunpack.c.l.b16 %v306
      %v339 = vunpack.c.l.b16 %v307
      %v340 = vunpack.c.l.b16 %v308
      %v341 = vunpack.c.l.b16 %v309
      %v342 = vunpack.c.l.b16 %v310
      %v343 = vunpack.c.l.b16 %v311
      %v344 = vunpack.c.l.b16 %v312
      %v345 = vunpack.c.l.b16 %v313
      %v346 = vunpack.c.l.b16 %v314
      %v347 = vunpack.c.l.b16 %v315
      %v348 = vunpack.c.l.b16 %v316
      %v349 = vpack.c.b16 %v334, %v333
      %v350 = vpack.c.b16 %v336, %v335
      %v351 = vpack.c.b16 %v338, %v337
      %v352 = vpack.c.b16 %v340, %v339
      %v353 = vpack.c.b16 %v342, %v341
      %v354 = vpack.c.b16 %v344, %v343
      %v355 = vpack.c.b16 %v346, %v345
      %v356 = vpack.c.b16 %v348, %v347
      %365 = vmatpush.bf16.msra.mxu0 %v356
      %366 = vmatpush.bf16.msra.mxu0 %v355
      %367 = vmatpush.bf16.msra.mxu0 %v354
      %368 = vmatpush.bf16.msra.mxu0 %v353
      %369 = vmatpush.bf16.msra.mxu0 %v352
      %370 = vmatpush.bf16.msra.mxu0 %v351
      %371 = vmatpush.bf16.msra.mxu0 %v350
      %372 = vmatpush.bf16.msra.mxu0 %v349
      %373 = vmatmul.bf16.gmra.mxu0 %v298
      %v374 = vpop.f32.mrf.mxu0
      %v375 = vadd.f32 0.0, %v374
      %v376 = vpop.f32.mrf.mxu0
      %v377 = vadd.f32 0.0, %v376
      %378 = vdwg.mxu0
      %v379 = vadd.f32 %v299, %v375
      %v380 = vadd.f32 %v300, %v377
      %v381 = vmax.f32 %v379, 0.0
      %v382 = vmax.f32 %v380, 0.0
      %v383 = vpack.c.bf16 %v381, %v381
      %v384 = vpack.c.bf16 %v382, %v382
      %385 = vst [vmem:[#allocation12] sm:$0xf] %v383
      %386 = vst [vmem:[#allocation12 + $0x4] sm:$0xf] %v384
    $region53: #{tpu_custom_call.1} parent=1 // pred_fallthru
      _
    // Predicated region
    $region54: #{tpu_custom_call.1} parent=1 // pred_check
      _
    $region55: #{tpu_custom_call.1} parent=1 // pred_check_branch
      %388 = sbr.rel (0) target = $region57
    $region56: #{tpu_custom_call.1} parent=1 // pred_region
      %390 = vsyncadd [#allocation6], 0
      %s391 = sshll.u32 [#allocation12], 4
      %s392 = int_to_ptr.vmem [resolvable:$true] %s391
      %s393 = sshll.u32 %s7, 4
      %s394 = int_to_ptr.hbm [resolvable:$true] %s393
      %399 = dma.vmem_to_hbm [thread:$0]  %s392, 128, %s394, [#allocation6], 64, 64, 4
    $region57: #{tpu_custom_call.1} parent=1 // pred_fallthru
      _
    // Predicated region
    $region58: #{tpu_custom_call.1} parent=1 // pred_check
      _
    $region59: #{tpu_custom_call.1} parent=1 // pred_check_branch
      %401 = sbr.rel (0) target = $region61
    $region60: #{tpu_custom_call.1} parent=1 // pred_region
      %403 = dma.done [#allocation6], 128
    $region61: #{tpu_custom_call.1} parent=1 // pred_fallthru
      _
    %404 = vsyncpa [#allocation5], 1
    %405 = vsyncpa [#allocation8], 1
    %406 = vsyncpa [#allocation11], 1
    %407 = vsyncpa [#allocation6], 1

</llo_original>
